<compile_context>
chip_gen: v7x
topology: tpu7x:2x2x1
jax: 0.10.0
libtpu: 0.0.40
codegen_flags: <defaults>
</compile_context>

<pallas_src>
import jax
import jax.numpy as jnp
from jax.experimental import pallas as pl
from jax.experimental.pallas import tpu as pltpu

_LANE = 128
_SUBLANE = 8


def _highway_kernel(x_ref, w_ref, b_ref, o_ref):
    x = x_ref[...]                                            # (tb, Dp), input dtype (f32)
    # One fused MXU matmul: columns [0, Dp) are proj logits, [Dp, 2Dp) are gate logits.
    y = jnp.dot(x.astype(w_ref.dtype), w_ref[...],
                preferred_element_type=jnp.float32) + b_ref[...]
    dp = o_ref.shape[-1]
    proj = jnp.maximum(y[:, :dp], 0.0)                        # relu (f32, VPU)
    gate = jax.nn.sigmoid(y[:, dp:])                          # sigmoid (f32, EUP)
    xf = x.astype(jnp.float32)
    # gate*(proj - x) + x  ==  proj*gate + (1-gate)*x, one fewer multiply.
    o_ref[...] = (gate * (proj - xf) + xf).astype(o_ref.dtype)


def prepare_highway_params(w_proj, b_proj, w_gate, b_gate, *, mxu_dtype=jnp.bfloat16):
    """Do the weight layout work ONCE, outside the hot path.

    torch layout in:  w_* is (out_features, in_features), b_* is (out_features,).
    Returns (w_cat, b_cat, d, d_pad) with
      w_cat : (d_pad, 2*d_pad) in `mxu_dtype`, so  x @ w_cat = [proj_logits | gate_logits]
      b_cat : (1, 2*d_pad) float32
    d is lane-padded to d_pad (multiple of 128) with zeros, which leaves the valid
    output columns numerically unchanged.
    """
    if mxu_dtype is None:
        mxu_dtype = jnp.float32
    d = w_proj.shape[0]
    d_pad = max(_LANE, ((d + _LANE - 1) // _LANE) * _LANE)
    pad = d_pad - d

    wp_t = jnp.asarray(w_proj, jnp.float32).T                 # (in, out)
    wg_t = jnp.asarray(w_gate, jnp.float32).T
    bp = jnp.asarray(b_proj, jnp.float32)
    bg = jnp.asarray(b_gate, jnp.float32)
    if pad:
        wp_t = jnp.pad(wp_t, ((0, pad), (0, pad)))
        wg_t = jnp.pad(wg_t, ((0, pad), (0, pad)))
        bp = jnp.pad(bp, (0, pad))
        bg = jnp.pad(bg, (0, pad))

    w_cat = jnp.concatenate([wp_t, wg_t], axis=1).astype(mxu_dtype)   # (d_pad, 2*d_pad)
    b_cat = jnp.concatenate([bp, bg]).reshape(1, 2 * d_pad).astype(jnp.float32)
    return w_cat, b_cat, d, d_pad


def _pick_tile_b(batch, d_pad, io_bytes, w_bytes, budget_bytes):
    """Largest multiple of 8 rows whose double-buffered x/out tiles + resident
    weights fit in the VMEM budget (budget chosen to be safe on v7x's 64 MiB)."""
    # Assume worst case (double-buffered weights) in case Buffered(1) is unavailable.
    resident = 2 * d_pad * (2 * d_pad) * w_bytes + 2 * (2 * d_pad) * 4
    per_row = 2 * d_pad * (2 * io_bytes)          # 2 buffers each of x-tile and out-tile
    avail = max(budget_bytes - resident, per_row * _SUBLANE)
    tb = (int(avail // per_row) // _SUBLANE) * _SUBLANE
    tb = max(_SUBLANE, min(tb, 2048))             # 512+ rows already ~85% of HBM roofline
    batch_rounded = ((batch + _SUBLANE - 1) // _SUBLANE) * _SUBLANE
    return min(tb, max(_SUBLANE, batch_rounded))


def highway_forward(x, params, *, tile_b=None,
                    vmem_budget_bytes=40 * 1024 * 1024,
                    single_buffer_weights=True):
    """x: (B, D) float32. params: output of prepare_highway_params."""
    w_cat, b_cat, d, d_pad = params
    batch = x.shape[0]
    assert x.shape[1] == d

    x_in = x if d_pad == d else jnp.pad(x, ((0, 0), (0, d_pad - d)))

    if tile_b is None:
        tile_b = _pick_tile_b(batch, d_pad, x.dtype.itemsize,
                              w_cat.dtype.itemsize, vmem_budget_bytes)

    grid = (pl.cdiv(batch, tile_b),)

    # Only raise the scoped VMEM limit when the estimate actually exceeds the
    # default (keeps us well inside v7x's 64 MiB physical VMEM).
    est = (2 * d_pad * (2 * d_pad) * w_cat.dtype.itemsize
           + 2 * 2 * tile_b * d_pad * x.dtype.itemsize
           + 2 * 2 * (2 * d_pad) * 4)
    vmem_limit = None
    if est > 24 * 1024 * 1024:
        vmem_limit = min(max(int(est * 3 // 2), 32 * 1024 * 1024), 48 * 1024 * 1024)

    def _run(use_buffered):
        if use_buffered:
            # Constant-index residents: one buffer is enough, skip double-buffering.
            w_spec = pl.BlockSpec((d_pad, 2 * d_pad), lambda i: (0, 0),
                                  pipeline_mode=pl.Buffered(1))
            b_spec = pl.BlockSpec((1, 2 * d_pad), lambda i: (0, 0),
                                  pipeline_mode=pl.Buffered(1))
        else:
            w_spec = pl.BlockSpec((d_pad, 2 * d_pad), lambda i: (0, 0))
            b_spec = pl.BlockSpec((1, 2 * d_pad), lambda i: (0, 0))

        cp_kwargs = dict(dimension_semantics=("parallel",))
        if vmem_limit is not None:
            cp_kwargs["vmem_limit_bytes"] = vmem_limit

        return pl.pallas_call(
            _highway_kernel,
            out_shape=jax.ShapeDtypeStruct((batch, d_pad), x.dtype),
            grid_spec=pltpu.PrefetchScalarGridSpec(
                num_scalar_prefetch=0,
                grid=grid,
                in_specs=[
                    pl.BlockSpec((tile_b, d_pad), lambda i: (i, 0)),   # x tile
                    w_spec,                                            # fused [Wp|Wg]^T
                    b_spec,                                            # fused [bp|bg]
                ],
                out_specs=pl.BlockSpec((tile_b, d_pad), lambda i: (i, 0)),
            ),
            compiler_params=pltpu.CompilerParams(**cp_kwargs),
        )(x_in, w_cat, b_cat)

    try:
        out = jax.block_until_ready(_run(single_buffer_weights))
    except Exception:
        if not single_buffer_weights:
            raise
        # pipeline_mode=pl.Buffered(1) not supported by this jax version -> default buffering.
        out = jax.block_until_ready(_run(False))

    if d_pad != d:
        out = out[:, :d]
    return out


def highway_reference(x, w_proj, b_proj, w_gate, b_gate, *, mxu_dtype=None):
    xw, wp, wg = x, w_proj, w_gate
    if mxu_dtype is not None:
        xw = x.astype(mxu_dtype)
        wp = w_proj.astype(mxu_dtype)
        wg = w_gate.astype(mxu_dtype)
    proj = jax.nn.relu(jnp.dot(xw, wp.T, preferred_element_type=jnp.float32) + b_proj)
    gate = jax.nn.sigmoid(jnp.dot(xw, wg.T, preferred_element_type=jnp.float32) + b_gate)
    return gate * (proj - x) + x


if __name__ == "__main__":
    word_dimension = 32
    batch = 8

    key = jax.random.PRNGKey(0)
    kx, kwp, kbp, kwg, kbg = jax.random.split(key, 5)

    x = jax.random.normal(kx, (batch, word_dimension), dtype=jnp.float32)
    # Deterministic init mimicking nn.Linear's uniform(-1/sqrt(D), 1/sqrt(D))
    bound = 1.0 / (word_dimension ** 0.5)
    w_proj = jax.random.uniform(kwp, (word_dimension, word_dimension),
                                minval=-bound, maxval=bound, dtype=jnp.float32)
    b_proj = jax.random.uniform(kbp, (word_dimension,),
                                minval=-bound, maxval=bound, dtype=jnp.float32)
    w_gate = jax.random.uniform(kwg, (word_dimension, word_dimension),
                                minval=-bound, maxval=bound, dtype=jnp.float32)
    b_gate = jax.random.uniform(kbg, (word_dimension,),
                                minval=-bound, maxval=bound, dtype=jnp.float32)

    # Weight prep happens once, outside the hot path (transpose/pad/fuse/bf16 cast).
    params = prepare_highway_params(w_proj, b_proj, w_gate, b_gate,
                                    mxu_dtype=jnp.bfloat16)

    out = highway_forward(x, params)
    out = jax.block_until_ready(out)

    assert out.shape == (batch, word_dimension)

    # Tight check vs a reference that uses the same bf16-MXU / f32-accumulate path.
    ref_matched = highway_reference(x, w_proj, b_proj, w_gate, b_gate,
                                    mxu_dtype=jnp.bfloat16)
    assert jnp.allclose(out, ref_matched, atol=1e-4, rtol=1e-4), \
        "mismatch vs matched-precision reference"

    # Looser check vs the pure-f32 reference (bf16 MXU inputs cost ~1e-3 abs error here).
    ref_f32 = highway_reference(x, w_proj, b_proj, w_gate, b_gate)
    assert jnp.allclose(out, ref_f32, atol=5e-2, rtol=5e-2), \
        "mismatch vs f32 reference"

    print("KERNEL_OK")
</pallas_src>

<mosaic_0001>
module attributes {stable_mosaic.version = 11 : i64} {
  func.func @_highway_kernel(%arg0: i32, %arg1: memref<8x128xf32, #tpu.memory_space<vmem>>, %arg2: memref<128x256xbf16, #tpu.memory_space<vmem>>, %arg3: memref<1x256xf32, #tpu.memory_space<vmem>>, %arg4: memref<8x128xf32, #tpu.memory_space<vmem>>) attributes {dimension_semantics = [#tpu.dimension_semantics<parallel>], iteration_bounds = array<i64: 1>, scalar_prefetch = 0 : i64, scratch_operands = 0 : i64, tpu.core_type = #tpu.core_type<tc>, window_params = [{transform_indices = @transform_0, window_bounds = array<i64: 8, 128>}, {pipeline_mode = #tpu.pipeline_mode<synchronous>, transform_indices = @transform_1, window_bounds = array<i64: 128, 256>}, {pipeline_mode = #tpu.pipeline_mode<synchronous>, transform_indices = @transform_2, window_bounds = array<i64: 1, 256>}, {transform_indices = @transform_3, window_bounds = array<i64: 8, 128>}]} {
    %c0 = arith.constant 0 : index
    %c0_0 = arith.constant 0 : index
    %0 = vector.load %arg1[%c0, %c0_0] : memref<8x128xf32, #tpu.memory_space<vmem>>, vector<8x128xf32>
    %1 = arith.truncf %0 : vector<8x128xf32> to vector<8x128xbf16>
    %c0_1 = arith.constant 0 : index
    %c0_2 = arith.constant 0 : index
    %2 = vector.load %arg2[%c0_1, %c0_2] : memref<128x256xbf16, #tpu.memory_space<vmem>>, vector<128x256xbf16>
    %cst = arith.constant dense<0.000000e+00> : vector<8x256xf32>
    %3 = tpu.matmul %1, %2, %cst {dimension_numbers = #tpu.dot_dimension_numbers<[1], [0], [0], [1], [0, 0, 1, 1], [], []>} : vector<8x128xbf16>, vector<128x256xbf16>, vector<8x256xf32> -> vector<8x256xf32>
    %c0_3 = arith.constant 0 : index
    %c0_4 = arith.constant 0 : index
    %4 = vector.load %arg3[%c0_3, %c0_4] : memref<1x256xf32, #tpu.memory_space<vmem>>, vector<1x256xf32>
    %5 = vector.broadcast %4 : vector<1x256xf32> to vector<8x256xf32>
    %6 = arith.addf %3, %5 : vector<8x256xf32>
    %7 = vector.extract_strided_slice %6 {offsets = [0, 0], sizes = [8, 128], strides = [1, 1]} : vector<8x256xf32> to vector<8x128xf32>
    %cst_5 = arith.constant 0.000000e+00 : f32
    %8 = vector.broadcast %cst_5 : f32 to vector<8x128xf32>
    %9 = arith.maximumf %7, %8 : vector<8x128xf32>
    %10 = vector.extract_strided_slice %6 {offsets = [0, 128], sizes = [8, 128], strides = [1, 1]} : vector<8x256xf32> to vector<8x128xf32>
    %11 = arith.negf %10 : vector<8x128xf32>
    %12 = math.exp %11 : vector<8x128xf32>
    %cst_6 = arith.constant 1.000000e+00 : f32
    %13 = vector.broadcast %cst_6 : f32 to vector<8x128xf32>
    %14 = arith.addf %13, %12 : vector<8x128xf32>
    %15 = arith.divf %13, %14 : vector<8x128xf32>
    %16 = arith.subf %9, %0 : vector<8x128xf32>
    %17 = arith.mulf %15, %16 : vector<8x128xf32>
    %18 = arith.addf %17, %0 : vector<8x128xf32>
    %c0_7 = arith.constant 0 : index
    %c0_8 = arith.constant 0 : index
    %19 = vector.load %arg4[%c0_7, %c0_8] : memref<8x128xf32, #tpu.memory_space<vmem>>, vector<8x128xf32>
    tpu.vector_store %arg4[%c0_7, %c0_8], %18 {strides = array<i32>} : memref<8x128xf32, #tpu.memory_space<vmem>>, vector<8x128xf32>,
    return
  }
  func.func @transform_0(%arg0: i32) -> (i32, i32) {
    %c0_i32 = arith.constant 0 : i32
    %c0_i32_0 = arith.constant 0 : i32
    return %arg0, %c0_i32 : i32, i32
  }
  func.func @transform_1(%arg0: i32) -> (i32, i32) {
    %c0_i32 = arith.constant 0 : i32
    %c0_i32_0 = arith.constant 0 : i32
    %c0_i32_1 = arith.constant 0 : i32
    return %c0_i32, %c0_i32_0 : i32, i32
  }
  func.func @transform_2(%arg0: i32) -> (i32, i32) {
    %c0_i32 = arith.constant 0 : i32
    %c0_i32_0 = arith.constant 0 : i32
    %c0_i32_1 = arith.constant 0 : i32
    return %c0_i32, %c0_i32_0 : i32, i32
  }
  func.func @transform_3(%arg0: i32) -> (i32, i32) {
    %c0_i32 = arith.constant 0 : i32
    %c0_i32_0 = arith.constant 0 : i32
    return %arg0, %c0_i32 : i32, i32
  }
}

module attributes {stable_mosaic.version = 11 : i64} {
  func.func @_highway_kernel(%arg0: i32, %arg1: memref<8x128xf32, #tpu.memory_space<vmem>>, %arg2: memref<128x256xbf16, #tpu.memory_space<vmem>>, %arg3: memref<1x256xf32, #tpu.memory_space<vmem>>, %arg4: memref<8x128xf32, #tpu.memory_space<vmem>>) attributes {dimension_semantics = [#tpu.dimension_semantics<parallel>], iteration_bounds = array<i64: 1>, scalar_prefetch = 0 : i64, scratch_operands = 0 : i64, tpu.core_type = #tpu.core_type<tc>, window_params = [{transform_indices = @transform_0, window_bounds = array<i64: 8, 128>}, {pipeline_mode = #tpu.pipeline_mode<synchronous>, transform_indices = @transform_1, window_bounds = array<i64: 128, 256>}, {pipeline_mode = #tpu.pipeline_mode<synchronous>, transform_indices = @transform_2, window_bounds = array<i64: 1, 256>}, {transform_indices = @transform_3, window_bounds = array<i64: 8, 128>}]} {
    %c0 = arith.constant 0 : index
    %c0_0 = arith.constant 0 : index
    %0 = vector.load %arg1[%c0, %c0_0] : memref<8x128xf32, #tpu.memory_space<vmem>>, vector<8x128xf32>
    %1 = arith.truncf %0 : vector<8x128xf32> to vector<8x128xbf16>
    %c0_1 = arith.constant 0 : index
    %c0_2 = arith.constant 0 : index
    %2 = vector.load %arg2[%c0_1, %c0_2] : memref<128x256xbf16, #tpu.memory_space<vmem>>, vector<128x256xbf16>
    %cst = arith.constant dense<0.000000e+00> : vector<8x256xf32>
    %3 = tpu.matmul %1, %2, %cst {dimension_numbers = #tpu.dot_dimension_numbers<[1], [0], [0], [1], [0, 0, 1, 1], [], []>} : vector<8x128xbf16>, vector<128x256xbf16>, vector<8x256xf32> -> vector<8x256xf32>
    %c0_3 = arith.constant 0 : index
    %c0_4 = arith.constant 0 : index
    %4 = vector.load %arg3[%c0_3, %c0_4] : memref<1x256xf32, #tpu.memory_space<vmem>>, vector<1x256xf32>
    %5 = vector.broadcast %4 : vector<1x256xf32> to vector<8x256xf32>
    %6 = arith.addf %3, %5 : vector<8x256xf32>
    %7 = vector.extract_strided_slice %6 {offsets = [0, 0], sizes = [8, 128], strides = [1, 1]} : vector<8x256xf32> to vector<8x128xf32>
    %cst_5 = arith.constant 0.000000e+00 : f32
    %8 = vector.broadcast %cst_5 : f32 to vector<8x128xf32>
    %9 = arith.maximumf %7, %8 : vector<8x128xf32>
    %10 = vector.extract_strided_slice %6 {offsets = [0, 128], sizes = [8, 128], strides = [1, 1]} : vector<8x256xf32> to vector<8x128xf32>
    %11 = arith.negf %10 : vector<8x128xf32>
    %12 = math.exp %11 : vector<8x128xf32>
    %cst_6 = arith.constant 1.000000e+00 : f32
    %13 = vector.broadcast %cst_6 : f32 to vector<8x128xf32>
    %14 = arith.addf %13, %12 : vector<8x128xf32>
    %15 = arith.divf %13, %14 : vector<8x128xf32>
    %16 = arith.subf %9, %0 : vector<8x128xf32>
    %17 = arith.mulf %15, %16 : vector<8x128xf32>
    %18 = arith.addf %17, %0 : vector<8x128xf32>
    %c0_7 = arith.constant 0 : index
    %c0_8 = arith.constant 0 : index
    %19 = vector.load %arg4[%c0_7, %c0_8] : memref<8x128xf32, #tpu.memory_space<vmem>>, vector<8x128xf32>
    tpu.vector_store %arg4[%c0_7, %c0_8], %18 {strides = array<i32>} : memref<8x128xf32, #tpu.memory_space<vmem>>, vector<8x128xf32>,
    return
  }
  func.func @transform_0(%arg0: i32) -> (i32, i32) {
    %c0_i32 = arith.constant 0 : i32
    %c0_i32_0 = arith.constant 0 : i32
    return %arg0, %c0_i32 : i32, i32
  }
  func.func @transform_1(%arg0: i32) -> (i32, i32) {
    %c0_i32 = arith.constant 0 : i32
    %c0_i32_0 = arith.constant 0 : i32
    %c0_i32_1 = arith.constant 0 : i32
    return %c0_i32, %c0_i32_0 : i32, i32
  }
  func.func @transform_2(%arg0: i32) -> (i32, i32) {
    %c0_i32 = arith.constant 0 : i32
    %c0_i32_0 = arith.constant 0 : i32
    %c0_i32_1 = arith.constant 0 : i32
    return %c0_i32, %c0_i32_0 : i32, i32
  }
  func.func @transform_3(%arg0: i32) -> (i32, i32) {
    %c0_i32 = arith.constant 0 : i32
    %c0_i32_0 = arith.constant 0 : i32
    return %arg0, %c0_i32 : i32, i32
  }
}

</mosaic_0001>

<llo_original>
// kernel: tpu_custom_call.1
$region0: #{tpu_custom_call.1}
  #allocation0 [shape = 'u32[]', space=smem, size = 0x4, offset = 0x4, fixed_abs, tag = 'smem constant byte address 0x4 - core index']
  #allocation1 [shape = 'u32[144,128]{1,0:T(1,128)}', space=vmem, size = 0x12000, scoped, tag = 'internal scratch']
  %s0 = inlined_call_operand.hbm [shape: f32[8,128], index: 0, kind: input, shape index: {}]
  %s1 = inlined_call_operand.hbm [shape: bf16[128,256], index: 1, kind: input, shape index: {}]
  %s2 = inlined_call_operand.vmem [shape: f32[1,256], index: 2, kind: input, shape index: {}]
  %s3 = inlined_call_operand.hbm [shape: f32[8,128], index: 3, kind: output, shape index: {}]
  %s4 = sld [smem:[#allocation0]]
  $region30: #{tpu_custom_call.1} parent=0
    _
  %s6 = ssub.s32 1, %s4
  %s7 = scalar_select 0, %s6, %s4
  $region1: #{tpu_custom_call.1} parent=0
    #allocation2 [shape = 'u8[4096]{0}', space=vmem, size = 0x1000, scoped, tag = 'input window, operand 0, single buffered']
    #allocation3 [shape = 's32[1]{0}', space=sflag, size = 0x4, scoped, tag = 'scoped memory for tpu_custom_call.1']
    #allocation4 [shape = 's32[1]{0}', space=sflag, size = 0x4, scoped, tag = 'scoped memory for tpu_custom_call.1']
    #allocation5 [shape = 'u8[65536]{0}', space=vmem, size = 0x10000, scoped, tag = 'input window, operand 1, single buffered']
    #allocation6 [shape = 's32[1]{0}', space=sflag, size = 0x4, scoped, tag = 'scoped memory for tpu_custom_call.1']
    #allocation7 [shape = 'u8[4096]{0}', space=vmem, size = 0x1000, scoped, tag = 'output window, operand 0, single buffered']
    %8 = vsyncpa [#allocation3], 0
    %9 = vsyncpa [#allocation6], 0
    %10 = vsyncpa [#allocation4], 0
    // Predicated region
    $region2: #{tpu_custom_call.1} parent=1 // pred_check
      _
    $region3: #{tpu_custom_call.1} parent=1 // pred_check_branch
      %12 = sbr.rel (0) target = $region5
    $region4: #{tpu_custom_call.1} parent=1 // pred_region
      %s14 = ssub.s32 128, 128
      %15 = vsyncadd [#allocation3], %s14
      %s17 = sshll.u32 [#allocation2], 4
      %s18 = int_to_ptr.vmem [resolvable:$true] %s17
      %20 = dma.hbm_to_vmem [thread:$0]  %s0, 128, %s18, [#allocation3]
    $region5: #{tpu_custom_call.1} parent=1 // pred_fallthru
      _
    // Predicated region
    $region6: #{tpu_custom_call.1} parent=1 // pred_check
      _
    $region7: #{tpu_custom_call.1} parent=1 // pred_check_branch
      %22 = sbr.rel (0) target = $region9
    $region8: #{tpu_custom_call.1} parent=1 // pred_region
      %s24 = ssub.s32 2048, 2048
      %25 = vsyncadd [#allocation6], %s24
      %s26 = sshll.u32 [#allocation5], 4
      %s27 = int_to_ptr.vmem [resolvable:$true] %s26
      %32 = dma.hbm_to_vmem [thread:$0]  %s1, 2048, %s27, [#allocation6], 128, 128, 8
    $region9: #{tpu_custom_call.1} parent=1 // pred_fallthru
      _
    // Predicated region
    $region10: #{tpu_custom_call.1} parent=1 // pred_check
      _
    $region11: #{tpu_custom_call.1} parent=1 // pred_check_branch
      %34 = sbr.rel (0) target = $region13
    $region12: #{tpu_custom_call.1} parent=1 // pred_region
      _
    $region13: #{tpu_custom_call.1} parent=1 // pred_fallthru
      _
    // Predicated region
    $region14: #{tpu_custom_call.1} parent=1 // pred_check
      _
    $region15: #{tpu_custom_call.1} parent=1 // pred_check_branch
      %36 = sbr.rel (0) target = $region17
    $region16: #{tpu_custom_call.1} parent=1 // pred_region
      %37 = dma.done [#allocation3], 128
    $region17: #{tpu_custom_call.1} parent=1 // pred_fallthru
      _
    // Predicated region
    $region18: #{tpu_custom_call.1} parent=1 // pred_check
      _
    $region19: #{tpu_custom_call.1} parent=1 // pred_check_branch
      %39 = sbr.rel (0) target = $region21
    $region20: #{tpu_custom_call.1} parent=1 // pred_region
      %40 = dma.done [#allocation6], 2048
    $region21: #{tpu_custom_call.1} parent=1 // pred_fallthru
      _
    %v42 = vld [vmem:[#allocation2] sm:$0xff]
    %v43 = vpack.c.bf16 %v42, %v42
    %v44 = vld [vmem:[#allocation5] sm:$0xff]
    %v45 = vld [vmem:[#allocation5 + $0x8] sm:$0xff]
    %v46 = vld [vmem:[#allocation5 + $0x10] sm:$0xff]
    %v47 = vld [vmem:[#allocation5 + $0x18] sm:$0xff]
    %v48 = vld [vmem:[#allocation5 + $0x20] sm:$0xff]
    %v49 = vld [vmem:[#allocation5 + $0x28] sm:$0xff]
    %v50 = vld [vmem:[#allocation5 + $0x30] sm:$0xff]
    %v51 = vld [vmem:[#allocation5 + $0x38] sm:$0xff]
    %v52 = vld [vmem:[#allocation5 + $0x40] sm:$0xff]
    %v53 = vld [vmem:[#allocation5 + $0x48] sm:$0xff]
    %v54 = vld [vmem:[#allocation5 + $0x50] sm:$0xff]
    %v55 = vld [vmem:[#allocation5 + $0x58] sm:$0xff]
    %v56 = vld [vmem:[#allocation5 + $0x60] sm:$0xff]
    %v57 = vld [vmem:[#allocation5 + $0x68] sm:$0xff]
    %v58 = vld [vmem:[#allocation5 + $0x70] sm:$0xff]
    %v59 = vld [vmem:[#allocation5 + $0x78] sm:$0xff]
    %v60 = vld [vmem:[%s2] sm:$0x3]
    %v62 = vlaneseq
    %v63 = vshrl.u32 %v62, 7
    %v64 = vsub.s32 0, %v63
    %v65 = vrot.slane %v60, %v64
    %v66 = vlaneseq
    %v67 = vshrl.u32 %v66, 7
    %v68 = vsub.s32 1, %v67
    %v69 = vrot.slane %v60, %v68
    %v88 = vunpack.c.l.b16 %v44
    %v89 = vunpack.c.h.b16 %v44
    %v90 = vunpack.c.l.b16 %v45
    %v91 = vunpack.c.h.b16 %v45
    %v92 = vunpack.c.l.b16 %v46
    %v93 = vunpack.c.h.b16 %v46
    %v94 = vunpack.c.l.b16 %v47
    %v95 = vunpack.c.h.b16 %v47
    %v96 = vunpack.c.l.b16 %v48
    %v97 = vunpack.c.h.b16 %v48
    %v98 = vunpack.c.l.b16 %v49
    %v99 = vunpack.c.h.b16 %v49
    %v100 = vunpack.c.l.b16 %v50
    %v101 = vunpack.c.h.b16 %v50
    %v102 = vunpack.c.l.b16 %v51
    %v103 = vunpack.c.h.b16 %v51
    %v104 = vunpack.c.l.b16 %v52
    %v105 = vunpack.c.h.b16 %v52
    %v106 = vunpack.c.l.b16 %v53
    %v107 = vunpack.c.h.b16 %v53
    %v108 = vunpack.c.l.b16 %v54
    %v109 = vunpack.c.h.b16 %v54
    %v110 = vunpack.c.l.b16 %v55
    %v111 = vunpack.c.h.b16 %v55
    %v112 = vunpack.c.l.b16 %v56
    %v113 = vunpack.c.h.b16 %v56
    %v114 = vunpack.c.l.b16 %v57
    %v115 = vunpack.c.h.b16 %v57
    %v116 = vunpack.c.l.b16 %v58
    %v117 = vunpack.c.h.b16 %v58
    %v118 = vunpack.c.l.b16 %v59
    %v119 = vunpack.c.h.b16 %v59
    %v120 = vpack.c.b16 %v90, %v88
    %v121 = vpack.c.b16 %v91, %v89
    %v122 = vpack.c.b16 %v94, %v92
    %v123 = vpack.c.b16 %v95, %v93
    %v124 = vpack.c.b16 %v98, %v96
    %v125 = vpack.c.b16 %v99, %v97
    %v126 = vpack.c.b16 %v102, %v100
    %v127 = vpack.c.b16 %v103, %v101
    %v128 = vpack.c.b16 %v106, %v104
    %v129 = vpack.c.b16 %v107, %v105
    %v130 = vpack.c.b16 %v110, %v108
    %v131 = vpack.c.b16 %v111, %v109
    %v132 = vpack.c.b16 %v114, %v112
    %v133 = vpack.c.b16 %v115, %v113
    %v134 = vpack.c.b16 %v118, %v116
    %v135 = vpack.c.b16 %v119, %v117
    %152 = vmatprep.subr.bf16.mxu0 %v121
    %153 = vmatpush1.bf16.msra.mxu0 %v120
    %154 = vmatprep.subr.bf16.mxu0 %v123
    %155 = vmatpush1.bf16.msra.mxu0 %v122
    %156 = vmatprep.subr.bf16.mxu0 %v125
    %157 = vmatpush1.bf16.msra.mxu0 %v124
    %158 = vmatprep.subr.bf16.mxu0 %v127
    %159 = vmatpush1.bf16.msra.mxu0 %v126
    %160 = vmatprep.subr.bf16.mxu0 %v129
    %161 = vmatpush1.bf16.msra.mxu0 %v128
    %162 = vmatprep.subr.bf16.mxu0 %v131
    %163 = vmatpush1.bf16.msra.mxu0 %v130
    %164 = vmatprep.subr.bf16.mxu0 %v133
    %165 = vmatpush1.bf16.msra.mxu0 %v132
    %166 = vmatprep.subr.bf16.mxu0 %v135
    %167 = vmatpush1.bf16.msra.mxu0 %v134
    %168 = vmatprep.subr.bf16.mxu0 0
    %169 = vmatpush1.bf16.msra.mxu0 0
    %170 = vmatprep.subr.bf16.mxu0 0
    %171 = vmatpush1.bf16.msra.mxu0 0
    %172 = vmatprep.subr.bf16.mxu0 0
    %173 = vmatpush1.bf16.msra.mxu0 0
    %174 = vmatprep.subr.bf16.mxu0 0
    %175 = vmatpush1.bf16.msra.mxu0 0
    %176 = vmatprep.subr.bf16.mxu0 0
    %177 = vmatpush1.bf16.msra.mxu0 0
    %178 = vmatprep.subr.bf16.mxu0 0
    %179 = vmatpush1.bf16.msra.mxu0 0
    %180 = vmatprep.subr.bf16.mxu0 0
    %181 = vmatpush1.bf16.msra.mxu0 0
    %182 = vmatprep.subr.bf16.mxu0 0
    %183 = vmatpush1.bf16.msra.mxu0 0
    %184 = vmatprep.mubr.bf16.mxu0 0
    %185 = vmatmul.mubr.bf16.gmra.mrb[0].mxu0 %v43
    %v186 = vpop.f32.mrb[0].mxu0
    %v187 = vadd.f32 %v65, %v186
    %v188 = vpop.f32.mrb[0].mxu0
    %v189 = vadd.f32 %v69, %v188
    %v190 = vpop.f32.mrb[0].mxu0
    %v191 = vpop.f32.mrb[0].mxu0
    %192 = vdwg.mxu0
    %v193 = vmax.f32 %v187, 0.0
    %v194 = vxor.u32 %v189, 2147483648
    %v195 = vmul.f32 %v194, 1.442695
    %v196 = vpow.pop %v195
    %v197 = vadd.f32 %v196, 1.0
    %v198 = vrcp.pop %v197
    %v199 = vmul.f32 1.0, %v198
    %v200 = vsub.f32 %v193, %v42
    %v201 = vmul.f32 %v199, %v200
    %v202 = vadd.f32 %v201, %v42
    %203 = vst [vmem:[#allocation7] sm:$0xff] %v202
    // Predicated region
    $region22: #{tpu_custom_call.1} parent=1 // pred_check
      _
    $region23: #{tpu_custom_call.1} parent=1 // pred_check_branch
      %205 = sbr.rel (0) target = $region25
    $region24: #{tpu_custom_call.1} parent=1 // pred_region
      %s207 = ssub.s32 128, 128
      %208 = vsyncadd [#allocation4], %s207
      %s210 = sshll.u32 [#allocation7], 4
      %s211 = int_to_ptr.vmem [resolvable:$true] %s210
      %213 = dma.vmem_to_hbm [thread:$0]  %s211, 128, %s3, [#allocation4]
    $region25: #{tpu_custom_call.1} parent=1 // pred_fallthru
      _
    // Predicated region
    $region26: #{tpu_custom_call.1} parent=1 // pred_check
      _
    $region27: #{tpu_custom_call.1} parent=1 // pred_check_branch
      %215 = sbr.rel (0) target = $region29
    $region28: #{tpu_custom_call.1} parent=1 // pred_region
      %216 = dma.done [#allocation4], 128
    $region29: #{tpu_custom_call.1} parent=1 // pred_fallthru
      _
    %217 = vsyncpa [#allocation3], 1
    %218 = vsyncpa [#allocation6], 1
    %219 = vsyncpa [#allocation4], 1

// kernel: tpu_custom_call.1
$region0: #{tpu_custom_call.1}
  #allocation0 [shape = 'u32[]', space=smem, size = 0x4, offset = 0x4, fixed_abs, tag = 'smem constant byte address 0x4 - core index']
  #allocation1 [shape = 'u32[144,128]{1,0:T(1,128)}', space=vmem, size = 0x12000, scoped, tag = 'internal scratch']
  %s0 = inlined_call_operand.hbm [shape: f32[8,128], index: 0, kind: input, shape index: {}]
  %s1 = inlined_call_operand.hbm [shape: bf16[128,256], index: 1, kind: input, shape index: {}]
  %s2 = inlined_call_operand.vmem [shape: f32[1,256], index: 2, kind: input, shape index: {}]
  %s3 = inlined_call_operand.hbm [shape: f32[8,128], index: 3, kind: output, shape index: {}]
  %s4 = sld [smem:[#allocation0]]
  $region30: #{tpu_custom_call.1} parent=0
    _
  %s6 = ssub.s32 1, %s4
  %s7 = scalar_select 0, %s6, %s4
  $region1: #{tpu_custom_call.1} parent=0
    #allocation2 [shape = 'u8[4096]{0}', space=vmem, size = 0x1000, scoped, tag = 'input window, operand 0, single buffered']
    #allocation3 [shape = 's32[1]{0}', space=sflag, size = 0x4, scoped, tag = 'scoped memory for tpu_custom_call.1']
    #allocation4 [shape = 's32[1]{0}', space=sflag, size = 0x4, scoped, tag = 'scoped memory for tpu_custom_call.1']
    #allocation5 [shape = 'u8[65536]{0}', space=vmem, size = 0x10000, scoped, tag = 'input window, operand 1, single buffered']
    #allocation6 [shape = 's32[1]{0}', space=sflag, size = 0x4, scoped, tag = 'scoped memory for tpu_custom_call.1']
    #allocation7 [shape = 'u8[4096]{0}', space=vmem, size = 0x1000, scoped, tag = 'output window, operand 0, single buffered']
    %8 = vsyncpa [#allocation3], 0
    %9 = vsyncpa [#allocation6], 0
    %10 = vsyncpa [#allocation4], 0
    // Predicated region
    $region2: #{tpu_custom_call.1} parent=1 // pred_check
      _
    $region3: #{tpu_custom_call.1} parent=1 // pred_check_branch
      %12 = sbr.rel (0) target = $region5
    $region4: #{tpu_custom_call.1} parent=1 // pred_region
      %s14 = ssub.s32 128, 128
      %15 = vsyncadd [#allocation3], %s14
      %s17 = sshll.u32 [#allocation2], 4
      %s18 = int_to_ptr.vmem [resolvable:$true] %s17
      %20 = dma.hbm_to_vmem [thread:$0]  %s0, 128, %s18, [#allocation3]
    $region5: #{tpu_custom_call.1} parent=1 // pred_fallthru
      _
    // Predicated region
    $region6: #{tpu_custom_call.1} parent=1 // pred_check
      _
    $region7: #{tpu_custom_call.1} parent=1 // pred_check_branch
      %22 = sbr.rel (0) target = $region9
    $region8: #{tpu_custom_call.1} parent=1 // pred_region
      %s24 = ssub.s32 2048, 2048
      %25 = vsyncadd [#allocation6], %s24
      %s26 = sshll.u32 [#allocation5], 4
      %s27 = int_to_ptr.vmem [resolvable:$true] %s26
      %32 = dma.hbm_to_vmem [thread:$0]  %s1, 2048, %s27, [#allocation6], 128, 128, 8
    $region9: #{tpu_custom_call.1} parent=1 // pred_fallthru
      _
    // Predicated region
    $region10: #{tpu_custom_call.1} parent=1 // pred_check
      _
    $region11: #{tpu_custom_call.1} parent=1 // pred_check_branch
      %34 = sbr.rel (0) target = $region13
    $region12: #{tpu_custom_call.1} parent=1 // pred_region
      _
    $region13: #{tpu_custom_call.1} parent=1 // pred_fallthru
      _
    // Predicated region
    $region14: #{tpu_custom_call.1} parent=1 // pred_check
      _
    $region15: #{tpu_custom_call.1} parent=1 // pred_check_branch
      %36 = sbr.rel (0) target = $region17
    $region16: #{tpu_custom_call.1} parent=1 // pred_region
      %37 = dma.done [#allocation3], 128
    $region17: #{tpu_custom_call.1} parent=1 // pred_fallthru
      _
    // Predicated region
    $region18: #{tpu_custom_call.1} parent=1 // pred_check
      _
    $region19: #{tpu_custom_call.1} parent=1 // pred_check_branch
      %39 = sbr.rel (0) target = $region21
    $region20: #{tpu_custom_call.1} parent=1 // pred_region
      %40 = dma.done [#allocation6], 2048
    $region21: #{tpu_custom_call.1} parent=1 // pred_fallthru
      _
    %v42 = vld [vmem:[#allocation2] sm:$0xff]
    %v43 = vpack.c.bf16 %v42, %v42
    %v44 = vld [vmem:[#allocation5] sm:$0xff]
    %v45 = vld [vmem:[#allocation5 + $0x8] sm:$0xff]
    %v46 = vld [vmem:[#allocation5 + $0x10] sm:$0xff]
    %v47 = vld [vmem:[#allocation5 + $0x18] sm:$0xff]
    %v48 = vld [vmem:[#allocation5 + $0x20] sm:$0xff]
    %v49 = vld [vmem:[#allocation5 + $0x28] sm:$0xff]
    %v50 = vld [vmem:[#allocation5 + $0x30] sm:$0xff]
    %v51 = vld [vmem:[#allocation5 + $0x38] sm:$0xff]
    %v52 = vld [vmem:[#allocation5 + $0x40] sm:$0xff]
    %v53 = vld [vmem:[#allocation5 + $0x48] sm:$0xff]
    %v54 = vld [vmem:[#allocation5 + $0x50] sm:$0xff]
    %v55 = vld [vmem:[#allocation5 + $0x58] sm:$0xff]
    %v56 = vld [vmem:[#allocation5 + $0x60] sm:$0xff]
    %v57 = vld [vmem:[#allocation5 + $0x68] sm:$0xff]
    %v58 = vld [vmem:[#allocation5 + $0x70] sm:$0xff]
    %v59 = vld [vmem:[#allocation5 + $0x78] sm:$0xff]
    %v60 = vld [vmem:[%s2] sm:$0x3]
    %v62 = vlaneseq
    %v63 = vshrl.u32 %v62, 7
    %v64 = vsub.s32 0, %v63
    %v65 = vrot.slane %v60, %v64
    %v66 = vlaneseq
    %v67 = vshrl.u32 %v66, 7
    %v68 = vsub.s32 1, %v67
    %v69 = vrot.slane %v60, %v68
    %v88 = vunpack.c.l.b16 %v44
    %v89 = vunpack.c.h.b16 %v44
    %v90 = vunpack.c.l.b16 %v45
    %v91 = vunpack.c.h.b16 %v45
    %v92 = vunpack.c.l.b16 %v46
    %v93 = vunpack.c.h.b16 %v46
    %v94 = vunpack.c.l.b16 %v47
    %v95 = vunpack.c.h.b16 %v47
    %v96 = vunpack.c.l.b16 %v48
    %v97 = vunpack.c.h.b16 %v48
    %v98 = vunpack.c.l.b16 %v49
    %v99 = vunpack.c.h.b16 %v49
    %v100 = vunpack.c.l.b16 %v50
    %v101 = vunpack.c.h.b16 %v50
    %v102 = vunpack.c.l.b16 %v51
    %v103 = vunpack.c.h.b16 %v51
    %v104 = vunpack.c.l.b16 %v52
    %v105 = vunpack.c.h.b16 %v52
    %v106 = vunpack.c.l.b16 %v53
    %v107 = vunpack.c.h.b16 %v53
    %v108 = vunpack.c.l.b16 %v54
    %v109 = vunpack.c.h.b16 %v54
    %v110 = vunpack.c.l.b16 %v55
    %v111 = vunpack.c.h.b16 %v55
    %v112 = vunpack.c.l.b16 %v56
    %v113 = vunpack.c.h.b16 %v56
    %v114 = vunpack.c.l.b16 %v57
    %v115 = vunpack.c.h.b16 %v57
    %v116 = vunpack.c.l.b16 %v58
    %v117 = vunpack.c.h.b16 %v58
    %v118 = vunpack.c.l.b16 %v59
    %v119 = vunpack.c.h.b16 %v59
    %v120 = vpack.c.b16 %v90, %v88
    %v121 = vpack.c.b16 %v91, %v89
    %v122 = vpack.c.b16 %v94, %v92
    %v123 = vpack.c.b16 %v95, %v93
    %v124 = vpack.c.b16 %v98, %v96
    %v125 = vpack.c.b16 %v99, %v97
    %v126 = vpack.c.b16 %v102, %v100
    %v127 = vpack.c.b16 %v103, %v101
    %v128 = vpack.c.b16 %v106, %v104
    %v129 = vpack.c.b16 %v107, %v105
    %v130 = vpack.c.b16 %v110, %v108
    %v131 = vpack.c.b16 %v111, %v109
    %v132 = vpack.c.b16 %v114, %v112
    %v133 = vpack.c.b16 %v115, %v113
    %v134 = vpack.c.b16 %v118, %v116
    %v135 = vpack.c.b16 %v119, %v117
    %152 = vmatprep.subr.bf16.mxu0 %v121
    %153 = vmatpush1.bf16.msra.mxu0 %v120
    %154 = vmatprep.subr.bf16.mxu0 %v123
    %155 = vmatpush1.bf16.msra.mxu0 %v122
    %156 = vmatprep.subr.bf16.mxu0 %v125
    %157 = vmatpush1.bf16.msra.mxu0 %v124
    %158 = vmatprep.subr.bf16.mxu0 %v127
    %159 = vmatpush1.bf16.msra.mxu0 %v126
    %160 = vmatprep.subr.bf16.mxu0 %v129
    %161 = vmatpush1.bf16.msra.mxu0 %v128
    %162 = vmatprep.subr.bf16.mxu0 %v131
    %163 = vmatpush1.bf16.msra.mxu0 %v130
    %164 = vmatprep.subr.bf16.mxu0 %v133
    %165 = vmatpush1.bf16.msra.mxu0 %v132
    %166 = vmatprep.subr.bf16.mxu0 %v135
    %167 = vmatpush1.bf16.msra.mxu0 %v134
    %168 = vmatprep.subr.bf16.mxu0 0
    %169 = vmatpush1.bf16.msra.mxu0 0
    %170 = vmatprep.subr.bf16.mxu0 0
    %171 = vmatpush1.bf16.msra.mxu0 0
    %172 = vmatprep.subr.bf16.mxu0 0
    %173 = vmatpush1.bf16.msra.mxu0 0
    %174 = vmatprep.subr.bf16.mxu0 0
    %175 = vmatpush1.bf16.msra.mxu0 0
    %176 = vmatprep.subr.bf16.mxu0 0
    %177 = vmatpush1.bf16.msra.mxu0 0
    %178 = vmatprep.subr.bf16.mxu0 0
    %179 = vmatpush1.bf16.msra.mxu0 0
    %180 = vmatprep.subr.bf16.mxu0 0
    %181 = vmatpush1.bf16.msra.mxu0 0
    %182 = vmatprep.subr.bf16.mxu0 0
    %183 = vmatpush1.bf16.msra.mxu0 0
    %184 = vmatprep.mubr.bf16.mxu0 0
    %185 = vmatmul.mubr.bf16.gmra.mrb[0].mxu0 %v43
    %v186 = vpop.f32.mrb[0].mxu0
    %v187 = vadd.f32 %v65, %v186
    %v188 = vpop.f32.mrb[0].mxu0
    %v189 = vadd.f32 %v69, %v188
    %v190 = vpop.f32.mrb[0].mxu0
    %v191 = vpop.f32.mrb[0].mxu0
    %192 = vdwg.mxu0
    %v193 = vmax.f32 %v187, 0.0
    %v194 = vxor.u32 %v189, 2147483648
    %v195 = vmul.f32 %v194, 1.442695
    %v196 = vpow.pop %v195
    %v197 = vadd.f32 %v196, 1.0
    %v198 = vrcp.pop %v197
    %v199 = vmul.f32 1.0, %v198
    %v200 = vsub.f32 %v193, %v42
    %v201 = vmul.f32 %v199, %v200
    %v202 = vadd.f32 %v201, %v42
    %203 = vst [vmem:[#allocation7] sm:$0xff] %v202
    // Predicated region
    $region22: #{tpu_custom_call.1} parent=1 // pred_check
      _
    $region23: #{tpu_custom_call.1} parent=1 // pred_check_branch
      %205 = sbr.rel (0) target = $region25
    $region24: #{tpu_custom_call.1} parent=1 // pred_region
      %s207 = ssub.s32 128, 128
      %208 = vsyncadd [#allocation4], %s207
      %s210 = sshll.u32 [#allocation7], 4
      %s211 = int_to_ptr.vmem [resolvable:$true] %s210
      %213 = dma.vmem_to_hbm [thread:$0]  %s211, 128, %s3, [#allocation4]
    $region25: #{tpu_custom_call.1} parent=1 // pred_fallthru
      _
    // Predicated region
    $region26: #{tpu_custom_call.1} parent=1 // pred_check
      _
    $region27: #{tpu_custom_call.1} parent=1 // pred_check_branch
      %215 = sbr.rel (0) target = $region29
    $region28: #{tpu_custom_call.1} parent=1 // pred_region
      %216 = dma.done [#allocation4], 128
    $region29: #{tpu_custom_call.1} parent=1 // pred_fallthru
      _
    %217 = vsyncpa [#allocation3], 1
    %218 = vsyncpa [#allocation6], 1
    %219 = vsyncpa [#allocation4], 1

</llo_original>
